<compile_context>
chip_gen: v5e
topology: v5e:2x2
jax: 0.10.0
libtpu: 0.0.40
codegen_flags: <defaults>
</compile_context>

<pallas_src>
import jax
import jax.numpy as jnp
from jax import lax
from jax.experimental import pallas as pl
from jax.experimental.pallas import tpu as pltpu


def _sigmoid(z):
    # exp issues on the EUP; approx reciprocal also rides the EUP slot so the
    # VPU never sees the divide.
    return pl.reciprocal(1.0 + jnp.exp(-z), approx=True)


# ---------------------------------------------------------------------------
# Fused CBAM kernel: Bt batch elements per grid step.
# ---------------------------------------------------------------------------
def cbam_kernel(x_ref, w1t_ref, b1_ref, w2t_ref, b2x2_ref, tconv_ref, bsp_ref,
                o_ref):
    """
    x_ref     : (Bt, C, HW) f32  input feature maps, lane-dense
    w1t_ref   : (C, Cr)     f32  fc1 weight (transposed)
    b1_ref    : (1, Cr)     f32  fc1 bias
    w2t_ref   : (Cr, C)     f32  fc2 weight (transposed)
    b2x2_ref  : (1, C)      f32  2 * fc2 bias (avg + max branches folded)
    tconv_ref : (2*HW, HW)  bf16 7x7 zero-padded conv as dense linear operator
                                 rows [0:HW) = channel-max map, [HW:2HW) = mean
    bsp_ref   : (1,)        f32  conv bias (SMEM scalar)
    o_ref     : (Bt, C, HW) f32  output
    """
    x = x_ref[...]                                          # (Bt, C, HW)
    Bt, C, HW = x.shape

    # ------------------------- Channel gate -------------------------
    avg = jnp.sum(x, axis=2) * (1.0 / HW)                   # (Bt, C)
    mx = jnp.max(x, axis=2)                                 # (Bt, C)

    w1t = w1t_ref[...]                                      # (C, Cr)
    b1 = b1_ref[...]                                        # (1, Cr)
    h_avg = jnp.maximum(
        jnp.dot(avg, w1t, preferred_element_type=jnp.float32) + b1, 0.0)
    h_max = jnp.maximum(
        jnp.dot(mx, w1t, preferred_element_type=jnp.float32) + b1, 0.0)
    h_sum = h_avg + h_max                                   # (Bt, Cr)

    # W2@relu(.|avg) + b2 + W2@relu(.|max) + b2 == W2@(h_avg+h_max) + 2*b2
    att = (jnp.dot(h_sum, w2t_ref[...], preferred_element_type=jnp.float32)
           + b2x2_ref[...])                                 # (Bt, C)
    ch_scale = _sigmoid(att)                                # (Bt, C)

    xg = x * ch_scale[:, :, None]                           # (Bt, C, HW)

    # ------------------------- Spatial gate -------------------------
    cmax = jnp.max(xg, axis=1)                              # (Bt, HW)
    cmean = jnp.sum(xg, axis=1) * (1.0 / C)                 # (Bt, HW)
    comp = jnp.concatenate([cmax, cmean], axis=-1)          # (Bt, 2*HW)
    comp = comp.astype(tconv_ref.dtype)                     # bf16 MXU input

    # Zero-padded 7x7 conv over the (max, mean) stack: one fused MXU matmul.
    conv = (jnp.dot(comp, tconv_ref[...], preferred_element_type=jnp.float32)
            + bsp_ref[0])                                   # (Bt, HW)
    sp_scale = _sigmoid(conv)                               # (Bt, HW)

    o_ref[...] = (xg * sp_scale[:, None, :]).astype(o_ref.dtype)


# ---------------------------------------------------------------------------
# Weight-only preprocessing: 7x7 zero-padded conv -> dense (2, HW, HW) operator
#   conv_flat[j] = sum_c sum_i comp[c, i] * T[c, i, j]
# ---------------------------------------------------------------------------
def _conv7x7_as_matrix(sp_w, H, W):
    K = sp_w.shape[-1]
    P = (K - 1) // 2
    HW = H * W
    idx = jnp.arange(HW)
    ih = idx // W
    iw = idx % W
    dh = ih[:, None] - ih[None, :]                       # i_h - j_h  (HW, HW)
    dw = iw[:, None] - iw[None, :]                       # i_w - j_w
    valid = (jnp.abs(dh) <= P) & (jnp.abs(dw) <= P)
    kh = jnp.clip(dh + P, 0, K - 1)
    kw = jnp.clip(dw + P, 0, K - 1)
    w = sp_w[0]                                          # (2, K, K)
    t = jnp.where(valid[None, :, :], w[:, kh, kw], 0.0)  # (2, HW, HW)
    return t.astype(jnp.float32)


def _pick_batch_tile(B, desired=8):
    """Largest divisor of B that is <= desired and keeps >= 2 grid steps."""
    if B <= 1:
        return max(B, 1)
    bt = max(1, min(desired, B // 2))   # >= 2 grid steps (v7x has 2 TCs)
    while B % bt:
        bt -= 1
    return bt


# ---------------------------------------------------------------------------
# Wrapper
# ---------------------------------------------------------------------------
def cbam_pallas(x, params, *, desired_batch_tile=8):
    B, C, H, W = x.shape
    HW = H * W
    Cr = params["fc1_w"].shape[0]
    Bt = _pick_batch_tile(B, desired_batch_tile)

    # Lane-dense layout: HW = 256 is a multiple of 128, so the big loads and
    # stores are full-lane (unmasked vst).  Non-multiples still work but hit
    # masked partial stores (perf only).
    x_flat = x.reshape(B, C, HW).astype(jnp.float32)
    w1t = params["fc1_w"].T.astype(jnp.float32)          # (C, Cr)
    b1 = params["fc1_b"].reshape(1, Cr).astype(jnp.float32)
    w2t = params["fc2_w"].T.astype(jnp.float32)          # (Cr, C)
    b2x2 = (2.0 * params["fc2_b"]).reshape(1, C).astype(jnp.float32)
    # bf16 conv operator: halves the dominant HBM/VMEM term; accumulation is
    # still f32 (preferred_element_type) inside the kernel.
    t_conv = (_conv7x7_as_matrix(params["sp_w"], H, W)
              .reshape(2 * HW, HW).astype(jnp.bfloat16))
    b_sp = params["sp_b"].reshape(1).astype(jnp.float32)

    cost = pl.CostEstimate(
        flops=int(B * (2 * (2 * HW) * HW + 8 * C * HW + 8 * C * Cr)),
        transcendentals=int(2 * B * (C + HW)),
        bytes_accessed=int(2 * B * C * HW * 4 + 2 * HW * HW * 2),
    )

    # Grid-invariant weights: whole array resident in VMEM once, no per-step
    # pipelining / double-buffering.
    vmem_spec = pl.BlockSpec(memory_space=pltpu.MemorySpace.VMEM)

    out_flat = pl.pallas_call(
        cbam_kernel,
        out_shape=jax.ShapeDtypeStruct((B, C, HW), jnp.float32),
        grid=(B // Bt,),
        in_specs=[
            pl.BlockSpec((Bt, C, HW), lambda b: (b, 0, 0)),
            vmem_spec,                                   # w1t
            vmem_spec,                                   # b1
            vmem_spec,                                   # w2t
            vmem_spec,                                   # 2*b2
            vmem_spec,                                   # conv operator (bf16)
            pl.BlockSpec(memory_space=pltpu.MemorySpace.SMEM),   # conv bias
        ],
        out_specs=pl.BlockSpec((Bt, C, HW), lambda b: (b, 0, 0)),
        compiler_params=pltpu.CompilerParams(
            dimension_semantics=("parallel",),
            vmem_limit_bytes=32 * 1024 * 1024,
        ),
        cost_estimate=cost,
    )(x_flat, w1t, b1, w2t, b2x2, t_conv, b_sp)

    return out_flat.reshape(B, C, H, W)


# ---------------------------------------------------------------------------
# Pure-JAX reference (for correctness check)
# ---------------------------------------------------------------------------
def cbam_ref(x, p):
    def mlp(v):                                          # v: (B, C)
        h = jnp.maximum(v @ p["fc1_w"].T + p["fc1_b"], 0.0)
        return h @ p["fc2_w"].T + p["fc2_b"]

    avg = x.mean(axis=(2, 3))
    mx = x.max(axis=(2, 3))
    att = jax.nn.sigmoid(mlp(avg) + mlp(mx))             # (B, C)
    xg = x * att[:, :, None, None]

    cmax = xg.max(axis=1, keepdims=True)
    cmean = xg.mean(axis=1, keepdims=True)
    comp = jnp.concatenate([cmax, cmean], axis=1)        # (B, 2, H, W)
    conv = lax.conv_general_dilated(
        comp, p["sp_w"], window_strides=(1, 1), padding=((3, 3), (3, 3)),
        dimension_numbers=("NCHW", "OIHW", "NCHW")) + p["sp_b"][None, :, None, None]
    return xg * jax.nn.sigmoid(conv)


if __name__ == "__main__":
    B, C, H, W = 2, 32, 16, 16
    reduction_ratio = 16
    Cr = C // reduction_ratio

    key = jax.random.PRNGKey(0)
    k_x, k1, k2, k3, k4, k5, k6 = jax.random.split(key, 7)

    x = jax.random.normal(k_x, (B, C, H, W), dtype=jnp.float32)

    params = {
        "fc1_w": 0.2 * jax.random.normal(k1, (Cr, C), dtype=jnp.float32),
        "fc1_b": 0.1 * jax.random.normal(k2, (Cr,), dtype=jnp.float32),
        "fc2_w": 0.2 * jax.random.normal(k3, (C, Cr), dtype=jnp.float32),
        "fc2_b": 0.1 * jax.random.normal(k4, (C,), dtype=jnp.float32),
        "sp_w": 0.1 * jax.random.normal(k5, (1, 2, 7, 7), dtype=jnp.float32),
        "sp_b": 0.1 * jax.random.normal(k6, (1,), dtype=jnp.float32),
    }

    out = jax.block_until_ready(cbam_pallas(x, params))
    ref = jax.block_until_ready(cbam_ref(x, params))

    err = float(jnp.max(jnp.abs(out - ref)))
    # Error budget: bf16 rounding of the conv operator / compress inputs enters
    # pre-sigmoid (slope <= 0.25) and is scaled by |xg|; plus approx-reciprocal
    # in the sigmoids and default-precision MXU passes on both sides.
    assert err < 2e-2, f"mismatch vs reference: max abs err = {err}"
    print("KERNEL_OK")
</pallas_src>

<mosaic_0001>
module attributes {stable_mosaic.version = 11 : i64} {
  func.func @cbam_kernel(%arg0: i32, %arg1: memref<1x32x256xf32, #tpu.memory_space<vmem>>, %arg2: memref<32x2xf32, #tpu.memory_space<vmem>>, %arg3: memref<1x2xf32, #tpu.memory_space<vmem>>, %arg4: memref<2x32xf32, #tpu.memory_space<vmem>>, %arg5: memref<1x32xf32, #tpu.memory_space<vmem>>, %arg6: memref<512x256xbf16, #tpu.memory_space<vmem>>, %arg7: memref<1xf32, #tpu.memory_space<smem>>, %arg8: memref<1x32x256xf32, #tpu.memory_space<vmem>>) attributes {dimension_semantics = [#tpu.dimension_semantics<parallel>], iteration_bounds = array<i64: 2>, scalar_prefetch = 0 : i64, scratch_operands = 0 : i64, tpu.core_type = #tpu.core_type<tc>, window_params = [{transform_indices = @transform_0, window_bounds = array<i64: 1, 32, 256>}, {pipeline_mode = #tpu.pipeline_mode<synchronous>, transform_indices = @transform_1, window_bounds = array<i64: 32, 2>}, {pipeline_mode = #tpu.pipeline_mode<synchronous>, transform_indices = @transform_2, window_bounds = array<i64: 1, 2>}, {pipeline_mode = #tpu.pipeline_mode<synchronous>, transform_indices = @transform_3, window_bounds = array<i64: 2, 32>}, {pipeline_mode = #tpu.pipeline_mode<synchronous>, transform_indices = @transform_4, window_bounds = array<i64: 1, 32>}, {pipeline_mode = #tpu.pipeline_mode<synchronous>, transform_indices = @transform_5, window_bounds = array<i64: 512, 256>}, {transform_indices = @transform_6, window_bounds = array<i64: 1>}, {transform_indices = @transform_7, window_bounds = array<i64: 1, 32, 256>}]} {
    %c0 = arith.constant 0 : index
    %c0_0 = arith.constant 0 : index
    %c0_1 = arith.constant 0 : index
    %0 = vector.load %arg1[%c0, %c0_0, %c0_1] : memref<1x32x256xf32, #tpu.memory_space<vmem>>, vector<1x32x256xf32>
    %cst = arith.constant dense<0.000000e+00> : vector<1x32xf32>
    %1 = vector.multi_reduction <add>, %0, %cst [2] : vector<1x32x256xf32> to vector<1x32xf32>
    %cst_2 = arith.constant 3.906250e-03 : f32
    %2 = vector.broadcast %cst_2 : f32 to vector<1x32xf32>
    %3 = arith.mulf %1, %2 : vector<1x32xf32>
    %cst_3 = arith.constant dense<0xFF800000> : vector<1x32xf32>
    %4 = vector.multi_reduction <maximumf>, %0, %cst_3 [2] : vector<1x32x256xf32> to vector<1x32xf32>
    %c0_4 = arith.constant 0 : index
    %c0_5 = arith.constant 0 : index
    %5 = vector.load %arg2[%c0_4, %c0_5] : memref<32x2xf32, #tpu.memory_space<vmem>>, vector<32x2xf32>
    %c0_6 = arith.constant 0 : index
    %c0_7 = arith.constant 0 : index
    %6 = vector.load %arg3[%c0_6, %c0_7] : memref<1x2xf32, #tpu.memory_space<vmem>>, vector<1x2xf32>
    %cst_8 = arith.constant dense<0.000000e+00> : vector<1x2xf32>
    %7 = tpu.matmul %3, %5, %cst_8 {dimension_numbers = #tpu.dot_dimension_numbers<[1], [0], [0], [1], [0, 0, 1, 1], [], []>} : vector<1x32xf32>, vector<32x2xf32>, vector<1x2xf32> -> vector<1x2xf32>
    %8 = arith.addf %7, %6 : vector<1x2xf32>
    %cst_9 = arith.constant 0.000000e+00 : f32
    %9 = vector.broadcast %cst_9 : f32 to vector<1x2xf32>
    %10 = arith.maximumf %8, %9 : vector<1x2xf32>
    %cst_10 = arith.constant dense<0.000000e+00> : vector<1x2xf32>
    %11 = tpu.matmul %4, %5, %cst_10 {dimension_numbers = #tpu.dot_dimension_numbers<[1], [0], [0], [1], [0, 0, 1, 1], [], []>} : vector<1x32xf32>, vector<32x2xf32>, vector<1x2xf32> -> vector<1x2xf32>
    %12 = arith.addf %11, %6 : vector<1x2xf32>
    %cst_11 = arith.constant 0.000000e+00 : f32
    %13 = vector.broadcast %cst_11 : f32 to vector<1x2xf32>
    %14 = arith.maximumf %12, %13 : vector<1x2xf32>
    %15 = arith.addf %10, %14 : vector<1x2xf32>
    %c0_12 = arith.constant 0 : index
    %c0_13 = arith.constant 0 : index
    %16 = vector.load %arg4[%c0_12, %c0_13] : memref<2x32xf32, #tpu.memory_space<vmem>>, vector<2x32xf32>
    %cst_14 = arith.constant dense<0.000000e+00> : vector<1x32xf32>
    %17 = tpu.matmul %15, %16, %cst_14 {dimension_numbers = #tpu.dot_dimension_numbers<[1], [0], [0], [1], [0, 0, 1, 1], [], []>} : vector<1x2xf32>, vector<2x32xf32>, vector<1x32xf32> -> vector<1x32xf32>
    %c0_15 = arith.constant 0 : index
    %c0_16 = arith.constant 0 : index
    %18 = vector.load %arg5[%c0_15, %c0_16] : memref<1x32xf32, #tpu.memory_space<vmem>>, vector<1x32xf32>
    %19 = arith.addf %17, %18 : vector<1x32xf32>
    %cst_17 = arith.constant 0.000000e+00 : f32
    %20 = vector.broadcast %cst_17 : f32 to vector<1x32xf32>
    %21 = arith.subf %20, %19 : vector<1x32xf32>
    %22 = math.exp %21 : vector<1x32xf32>
    %cst_18 = arith.constant 1.000000e+00 : f32
    %23 = vector.broadcast %cst_18 : f32 to vector<1x32xf32>
    %24 = arith.addf %23, %22 : vector<1x32xf32>
    %25 = tpu.reciprocal %24 {approx = true} : vector<1x32xf32> -> vector<1x32xf32>
    %26 = vector.shape_cast %25 : vector<1x32xf32> to vector<1x32x1xf32>
    %27 = vector.broadcast %26 : vector<1x32x1xf32> to vector<1x32x256xf32>
    %28 = arith.mulf %0, %27 : vector<1x32x256xf32>
    %cst_19 = arith.constant dense<0xFF800000> : vector<1x256xf32>
    %29 = vector.multi_reduction <maximumf>, %28, %cst_19 [1] : vector<1x32x256xf32> to vector<1x256xf32>
    %cst_20 = arith.constant dense<0.000000e+00> : vector<1x256xf32>
    %30 = vector.multi_reduction <add>, %28, %cst_20 [1] : vector<1x32x256xf32> to vector<1x256xf32>
    %cst_21 = arith.constant 3.125000e-02 : f32
    %31 = vector.broadcast %cst_21 : f32 to vector<1x256xf32>
    %32 = arith.mulf %30, %31 : vector<1x256xf32>
    %33 = tpu.concatenate %29, %32 in 1 : vector<1x256xf32>, vector<1x256xf32> -> vector<1x512xf32>
    %34 = arith.truncf %33 : vector<1x512xf32> to vector<1x512xbf16>
    %c0_22 = arith.constant 0 : index
    %c0_23 = arith.constant 0 : index
    %35 = vector.load %arg6[%c0_22, %c0_23] : memref<512x256xbf16, #tpu.memory_space<vmem>>, vector<512x256xbf16>
    %cst_24 = arith.constant dense<0.000000e+00> : vector<1x256xf32>
    %36 = tpu.matmul %34, %35, %cst_24 {dimension_numbers = #tpu.dot_dimension_numbers<[1], [0], [0], [1], [0, 0, 1, 1], [], []>} : vector<1x512xbf16>, vector<512x256xbf16>, vector<1x256xf32> -> vector<1x256xf32>
    %c0_25 = arith.constant 0 : index
    %37 = memref.load %arg7[%c0_25] : memref<1xf32, #tpu.memory_space<smem>>
    %38 = vector.broadcast %37 : f32 to vector<1x256xf32>
    %39 = arith.addf %36, %38 : vector<1x256xf32>
    %cst_26 = arith.constant 0.000000e+00 : f32
    %40 = vector.broadcast %cst_26 : f32 to vector<1x256xf32>
    %41 = arith.subf %40, %39 : vector<1x256xf32>
    %42 = math.exp %41 : vector<1x256xf32>
    %cst_27 = arith.constant 1.000000e+00 : f32
    %43 = vector.broadcast %cst_27 : f32 to vector<1x256xf32>
    %44 = arith.addf %43, %42 : vector<1x256xf32>
    %45 = tpu.reciprocal %44 {approx = true} : vector<1x256xf32> -> vector<1x256xf32>
    %46 = vector.shape_cast %45 : vector<1x256xf32> to vector<1x1x256xf32>
    %47 = vector.broadcast %46 : vector<1x1x256xf32> to vector<1x32x256xf32>
    %48 = arith.mulf %28, %47 : vector<1x32x256xf32>
    %c0_28 = arith.constant 0 : index
    %c0_29 = arith.constant 0 : index
    %c0_30 = arith.constant 0 : index
    %49 = vector.load %arg8[%c0_28, %c0_29, %c0_30] : memref<1x32x256xf32, #tpu.memory_space<vmem>>, vector<1x32x256xf32>
    tpu.vector_store %arg8[%c0_28, %c0_29, %c0_30], %48 {strides = array<i32>} : memref<1x32x256xf32, #tpu.memory_space<vmem>>, vector<1x32x256xf32>,
    return
  }
  func.func @transform_0(%arg0: i32) -> (i32, i32, i32) {
    %c0_i32 = arith.constant 0 : i32
    %c0_i32_0 = arith.constant 0 : i32
    %c0_i32_1 = arith.constant 0 : i32
    return %arg0, %c0_i32, %c0_i32_0 : i32, i32, i32
  }
  func.func @transform_1(%arg0: i32) -> (i32, i32) {
    %c0_i32 = arith.constant 0 : i32
    %c0_i32_0 = arith.constant 0 : i32
    %c0_i32_1 = arith.constant 0 : i32
    return %c0_i32, %c0_i32_0 : i32, i32
  }
  func.func @transform_2(%arg0: i32) -> (i32, i32) {
    %c0_i32 = arith.constant 0 : i32
    %c0_i32_0 = arith.constant 0 : i32
    %c0_i32_1 = arith.constant 0 : i32
    return %c0_i32, %c0_i32_0 : i32, i32
  }
  func.func @transform_3(%arg0: i32) -> (i32, i32) {
    %c0_i32 = arith.constant 0 : i32
    %c0_i32_0 = arith.constant 0 : i32
    %c0_i32_1 = arith.constant 0 : i32
    return %c0_i32, %c0_i32_0 : i32, i32
  }
  func.func @transform_4(%arg0: i32) -> (i32, i32) {
    %c0_i32 = arith.constant 0 : i32
    %c0_i32_0 = arith.constant 0 : i32
    %c0_i32_1 = arith.constant 0 : i32
    return %c0_i32, %c0_i32_0 : i32, i32
  }
  func.func @transform_5(%arg0: i32) -> (i32, i32) {
    %c0_i32 = arith.constant 0 : i32
    %c0_i32_0 = arith.constant 0 : i32
    %c0_i32_1 = arith.constant 0 : i32
    return %c0_i32, %c0_i32_0 : i32, i32
  }
  func.func @transform_6(%arg0: i32) -> i32 {
    %c0_i32 = arith.constant 0 : i32
    %c0_i32_0 = arith.constant 0 : i32
    return %c0_i32 : i32
  }
  func.func @transform_7(%arg0: i32) -> (i32, i32, i32) {
    %c0_i32 = arith.constant 0 : i32
    %c0_i32_0 = arith.constant 0 : i32
    %c0_i32_1 = arith.constant 0 : i32
    return %arg0, %c0_i32, %c0_i32_0 : i32, i32, i32
  }
}

</mosaic_0001>

<llo_original>
// kernel: tpu_custom_call.1
$region0: #{tpu_custom_call.1}
  #allocation0 [shape = 'u32[]', space=smem, size = 0x4, offset = 0x4, fixed_abs, tag = 'smem constant byte address 0x4 - core index']
  #allocation1 [shape = 'u32[72,128]{1,0:T(1,128)}', space=vmem, size = 0x9000, scoped, tag = 'internal scratch']
  #allocation2 [shape = 'f32[1]{0:T(128)S(6)}', space=smem, size = 0x200, scoped, tag = 'scoped memory for tpu_custom_call.1']
  %s0 = inlined_call_operand.hbm [shape: f32[2,32,256], index: 0, kind: input, shape index: {}]
  %s1 = inlined_call_operand.vmem [shape: f32[32,2], index: 1, kind: input, shape index: {}]
  %s2 = inlined_call_operand.vmem [shape: f32[1,2], index: 2, kind: input, shape index: {}]
  %s3 = inlined_call_operand.vmem [shape: f32[2,32], index: 3, kind: input, shape index: {}]
  %s4 = inlined_call_operand.vmem [shape: f32[1,32], index: 4, kind: input, shape index: {}]
  %s5 = inlined_call_operand.hbm [shape: bf16[512,256], index: 5, kind: input, shape index: {}]
  %s6 = inlined_call_operand.<no memory space> [shape: f32[1], index: 6, kind: input, shape index: {}]
  %s7 = inlined_call_operand.hbm [shape: f32[2,32,256], index: 7, kind: output, shape index: {}]
  %s8 = sld [smem:[#allocation0]]
  $region69: #{tpu_custom_call.1} parent=0
    _
  %s10 = ssub.s32 1, %s8
  %s11 = scalar_select 0, %s10, %s8
  %12 = sst [smem:[#allocation2]] %s6
  $region1: #{tpu_custom_call.1} parent=0
    #allocation3 [shape = 'u8[65536]{0}', space=vmem, size = 0x10000, scoped, tag = 'input window, operand 0']
    #allocation4 [shape = 's32[2]{0}', space=sflag, size = 0x8, scoped, tag = 'scoped memory for tpu_custom_call.1']
    #allocation5 [shape = 's32[2]{0}', space=sflag, size = 0x8, scoped, tag = 'scoped memory for tpu_custom_call.1']
    #allocation6 [shape = 'u8[262144]{0}', space=vmem, size = 0x40000, scoped, tag = 'input window, operand 5, single buffered']
    #allocation7 [shape = 's32[1]{0}', space=sflag, size = 0x4, scoped, tag = 'scoped memory for tpu_custom_call.1']
    #allocation8 [shape = 'u8[65536]{0}', space=vmem, size = 0x10000, scoped, tag = 'output window, operand 0']
    %13 = vsyncpa [#allocation4], 0
    %s14 = scalar_lea.sflag [#allocation4], 1
    %15 = vsyncpa %s14, 0
    %16 = vsyncpa [#allocation7], 0
    %17 = vsyncpa [#allocation5], 0
    %s18 = scalar_lea.sflag [#allocation5], 1
    %19 = vsyncpa %s18, 0
    loop: start=0, step=1, limit=4
    $region2: #{tpu_custom_call.1} parent=1 // loop_pre_header
      _
    $region3: #{tpu_custom_call.1} parent=1 // loop_header
      %s21 = sphi 0, %s25
      %p22 = scmp.ge.s32.totalorder %s21, 4
      %s31 = sphi 0, %s33
      %s34 = sphi 0, %s31
      %s35 = sphi 0, %s34
      %s51 = sphi 0, %s35
      %s55 = sphi 0, %s55
      %s57 = sphi 0, %s55
      %s58 = sphi 0, %s57
      %s72 = sphi 0, %s58
      %s76 = sphi 0, %s76
      %s78 = sphi 0, %s76
      %s79 = sphi 0, %s78
      %s93 = sphi 0, %s79
      %s97 = sphi 0, %s97
      %s99 = sphi 0, %s97
      %s100 = sphi 0, %s99
      %s114 = sphi 0, %s100
      %s118 = sphi 0, %s118
      %s120 = sphi 0, %s118
      %s121 = sphi 0, %s120
      %s135 = sphi 0, %s121
      %s139 = sphi 0, %s139
      %s141 = sphi 0, %s139
      %s142 = sphi 0, %s141
      %s156 = sphi 0, %s142
      %s160 = sphi 0, %s160
      %s162 = sphi 0, %s160
      %s163 = sphi 0, %s162
      %s177 = sphi 0, %s163
      %s183 = sphi 0, %s185
      %s186 = sphi 0, %s183
      %s187 = sphi 0, %s186
      %s203 = sphi 0, %s187
    $region4: #{tpu_custom_call.1} parent=1 // loop_header_branch
      %24 = sbr.rel (%p22) target = $region8
    $region5: #{tpu_custom_call.1} parent=1 // loop_body
      %s26 = ssub.s32 %s21, 1
      %s27 = ssub.s32 %s21, 2
      %s28 = sadd.s32 %s21, 1
      %s29 = ssub.s32 %s21, %s28
      %p30 = scmp.eq.s32.totalorder %s29, 0
      %s32 = sadd.s32 %s31, 1
      %s33 = scalar_select %p30, %s31, %s32
      %p36 = pneg %p30
      %p37 = scmp.eq.s32.totalorder %s21, 1
      %p38 = por %p36, %p37
      %p39 = scmp.ne.s32.totalorder %s31, %s34
      %p40 = scmp.eq.s32.totalorder %s21, 0
      %p41 = por %p39, %p40
      %p42 = scmp.ne.s32.totalorder %s31, %s34
      %p43 = scmp.eq.s32.totalorder %s26, 1
      %p44 = por %p42, %p43
      %p45 = scmp.ne.s32.totalorder %s34, %s35
      %p46 = scmp.eq.s32.totalorder %s26, 0
      %p47 = por %p45, %p46
      %p48 = scmp.ne.s32.totalorder %s34, %s35
      %p49 = scmp.eq.s32.totalorder %s27, 1
      %p50 = por %p48, %p49
      %p52 = scmp.ne.s32.totalorder %s35, %s51
      %p53 = scmp.eq.s32.totalorder %s27, 0
      %p54 = por %p52, %p53
      %s56 = sadd.s32 %s55, 1
      %p59 = scmp.eq.s32.totalorder %s21, 1
      %p60 = scmp.ne.s32.totalorder %s55, %s57
      %p61 = scmp.eq.s32.totalorder %s21, 0
      %p62 = por %p60, %p61
      %p63 = scmp.ne.s32.totalorder %s55, %s57
      %p64 = scmp.eq.s32.totalorder %s26, 1
      %p65 = por %p63, %p64
      %p66 = scmp.ne.s32.totalorder %s57, %s58
      %p67 = scmp.eq.s32.totalorder %s26, 0
      %p68 = por %p66, %p67
      %p69 = scmp.ne.s32.totalorder %s57, %s58
      %p70 = scmp.eq.s32.totalorder %s27, 1
      %p71 = por %p69, %p70
      %p73 = scmp.ne.s32.totalorder %s58, %s72
      %p74 = scmp.eq.s32.totalorder %s27, 0
      %p75 = por %p73, %p74
      %s77 = sadd.s32 %s76, 1
      %p80 = scmp.eq.s32.totalorder %s21, 1
      %p81 = scmp.ne.s32.totalorder %s76, %s78
      %p82 = scmp.eq.s32.totalorder %s21, 0
      %p83 = por %p81, %p82
      %p84 = scmp.ne.s32.totalorder %s76, %s78
      %p85 = scmp.eq.s32.totalorder %s26, 1
      %p86 = por %p84, %p85
      %p87 = scmp.ne.s32.totalorder %s78, %s79
      %p88 = scmp.eq.s32.totalorder %s26, 0
      %p89 = por %p87, %p88
      %p90 = scmp.ne.s32.totalorder %s78, %s79
      %p91 = scmp.eq.s32.totalorder %s27, 1
      %p92 = por %p90, %p91
      %p94 = scmp.ne.s32.totalorder %s79, %s93
      %p95 = scmp.eq.s32.totalorder %s27, 0
      %p96 = por %p94, %p95
      %s98 = sadd.s32 %s97, 1
      %p101 = scmp.eq.s32.totalorder %s21, 1
      %p102 = scmp.ne.s32.totalorder %s97, %s99
      %p103 = scmp.eq.s32.totalorder %s21, 0
      %p104 = por %p102, %p103
      %p105 = scmp.ne.s32.totalorder %s97, %s99
      %p106 = scmp.eq.s32.totalorder %s26, 1
      %p107 = por %p105, %p106
      %p108 = scmp.ne.s32.totalorder %s99, %s100
      %p109 = scmp.eq.s32.totalorder %s26, 0
      %p110 = por %p108, %p109
      %p111 = scmp.ne.s32.totalorder %s99, %s100
      %p112 = scmp.eq.s32.totalorder %s27, 1
      %p113 = por %p111, %p112
      %p115 = scmp.ne.s32.totalorder %s100, %s114
      %p116 = scmp.eq.s32.totalorder %s27, 0
      %p117 = por %p115, %p116
      %s119 = sadd.s32 %s118, 1
      %p122 = scmp.eq.s32.totalorder %s21, 1
      %p123 = scmp.ne.s32.totalorder %s118, %s120
      %p124 = scmp.eq.s32.totalorder %s21, 0
      %p125 = por %p123, %p124
      %p126 = scmp.ne.s32.totalorder %s118, %s120
      %p127 = scmp.eq.s32.totalorder %s26, 1
      %p128 = por %p126, %p127
      %p129 = scmp.ne.s32.totalorder %s120, %s121
      %p130 = scmp.eq.s32.totalorder %s26, 0
      %p131 = por %p129, %p130
      %p132 = scmp.ne.s32.totalorder %s120, %s121
      %p133 = scmp.eq.s32.totalorder %s27, 1
      %p134 = por %p132, %p133
      %p136 = scmp.ne.s32.totalorder %s121, %s135
      %p137 = scmp.eq.s32.totalorder %s27, 0
      %p138 = por %p136, %p137
      %s140 = sadd.s32 %s139, 1
      %p143 = scmp.eq.s32.totalorder %s21, 1
      %p144 = scmp.ne.s32.totalorder %s139, %s141
      %p145 = scmp.eq.s32.totalorder %s21, 0
      %p146 = por %p144, %p145
      %p147 = scmp.ne.s32.totalorder %s139, %s141
      %p148 = scmp.eq.s32.totalorder %s26, 1
      %p149 = por %p147, %p148
      %p150 = scmp.ne.s32.totalorder %s141, %s142
      %p151 = scmp.eq.s32.totalorder %s26, 0
      %p152 = por %p150, %p151
      %p153 = scmp.ne.s32.totalorder %s141, %s142
      %p154 = scmp.eq.s32.totalorder %s27, 1
      %p155 = por %p153, %p154
      %p157 = scmp.ne.s32.totalorder %s142, %s156
      %p158 = scmp.eq.s32.totalorder %s27, 0
      %p159 = por %p157, %p158
      %s161 = sadd.s32 %s160, 1
      %p164 = scmp.eq.s32.totalorder %s21, 1
      %p165 = scmp.ne.s32.totalorder %s160, %s162
      %p166 = scmp.eq.s32.totalorder %s21, 0
      %p167 = por %p165, %p166
      %p168 = scmp.ne.s32.totalorder %s160, %s162
      %p169 = scmp.eq.s32.totalorder %s26, 1
      %p170 = por %p168, %p169
      %p171 = scmp.ne.s32.totalorder %s162, %s163
      %p172 = scmp.eq.s32.totalorder %s26, 0
      %p173 = por %p171, %p172
      %p174 = scmp.ne.s32.totalorder %s162, %s163
      %p175 = scmp.eq.s32.totalorder %s27, 1
      %p176 = por %p174, %p175
      %p178 = scmp.ne.s32.totalorder %s163, %s177
      %p179 = scmp.eq.s32.totalorder %s27, 0
      %p180 = por %p178, %p179
      %s181 = ssub.s32 %s21, %s28
      %p182 = scmp.eq.s32.totalorder %s181, 0
      %s184 = sadd.s32 %s183, 1
      %s185 = scalar_select %p182, %s183, %s184
      %p188 = pneg %p182
      %p189 = scmp.eq.s32.totalorder %s21, 1
      %p190 = por %p188, %p189
      %p191 = scmp.ne.s32.totalorder %s183, %s186
      %p192 = scmp.eq.s32.totalorder %s21, 0
      %p193 = por %p191, %p192
      %p194 = scmp.ne.s32.totalorder %s183, %s186
      %p195 = scmp.eq.s32.totalorder %s26, 1
      %p196 = por %p194, %p195
      %p197 = scmp.ne.s32.totalorder %s186, %s187
      %p198 = scmp.eq.s32.totalorder %s26, 0
      %p199 = por %p197, %p198
      %p200 = scmp.ne.s32.totalorder %s186, %s187
      %p201 = scmp.eq.s32.totalorder %s27, 1
      %p202 = por %p200, %p201
      %p204 = scmp.ne.s32.totalorder %s187, %s203
      %p205 = scmp.eq.s32.totalorder %s27, 0
      %p206 = por %p204, %p205
      %p207 = scmp.le.s32.totalorder 1, %s21
      %p208 = scmp.lt.s32.totalorder %s21, 3
      %p209 = pnand %p207, %p208
      %p210 = pneg %p209
      // Predicated region
      $region9: #{tpu_custom_call.1} parent=5 // pred_check
        _
      $region10: #{tpu_custom_call.1} parent=5 // pred_check_branch
        %212 = sbr.rel (%p209) target = $region12
      $region11: #{tpu_custom_call.1} parent=5 // pred_region
        %s213 = ssub.s32 %s21, 1
        // Predicated region
        $region13: #{tpu_custom_call.1} parent=11 // pred_check
          %p214 = pneg %p68
        $region14: #{tpu_custom_call.1} parent=11 // pred_check_branch
          %216 = sbr.rel (%p214) target = $region16
        $region15: #{tpu_custom_call.1} parent=11 // pred_region
          _
        $region16: #{tpu_custom_call.1} parent=11 // pred_fallthru
          _
        // Predicated region
        $region17: #{tpu_custom_call.1} parent=11 // pred_check
          %p217 = pneg %p89
        $region18: #{tpu_custom_call.1} parent=11 // pred_check_branch
          %219 = sbr.rel (%p217) target = $region20
        $region19: #{tpu_custom_call.1} parent=11 // pred_region
          _
        $region20: #{tpu_custom_call.1} parent=11 // pred_fallthru
          _
        // Predicated region
        $region21: #{tpu_custom_call.1} parent=11 // pred_check
          %p220 = pneg %p110
        $region22: #{tpu_custom_call.1} parent=11 // pred_check_branch
          %222 = sbr.rel (%p220) target = $region24
        $region23: #{tpu_custom_call.1} parent=11 // pred_region
          _
        $region24: #{tpu_custom_call.1} parent=11 // pred_fallthru
          _
        // Predicated region
        $region25: #{tpu_custom_call.1} parent=11 // pred_check
          %p223 = pneg %p131
        $region26: #{tpu_custom_call.1} parent=11 // pred_check_branch
          %225 = sbr.rel (%p223) target = $region28
        $region27: #{tpu_custom_call.1} parent=11 // pred_region
          _
        $region28: #{tpu_custom_call.1} parent=11 // pred_fallthru
          _
        // Predicated region
        $region29: #{tpu_custom_call.1} parent=11 // pred_check
          %p226 = pneg %p152
        $region30: #{tpu_custom_call.1} parent=11 // pred_check_branch
          %228 = sbr.rel (%p226) target = $region32
        $region31: #{tpu_custom_call.1} parent=11 // pred_region
          %230 = vsyncadd [#allocation7], 0
          %s231 = sshll.u32 %s5, 4
          %s232 = int_to_ptr.hbm [resolvable:$true] %s231
          %s233 = sshll.u32 [#allocation6], 4
          %s234 = int_to_ptr.vmem [resolvable:$true] %s233
          %239 = dma.hbm_to_vmem [thread:$0]  %s232, 8192, %s234, [#allocation7], 128, 128, 8
        $region32: #{tpu_custom_call.1} parent=11 // pred_fallthru
          _
        // Predicated region
        $region33: #{tpu_custom_call.1} parent=11 // pred_check
          %p240 = pneg %p173
        $region34: #{tpu_custom_call.1} parent=11 // pred_check_branch
          %242 = sbr.rel (%p240) target = $region36
        $region35: #{tpu_custom_call.1} parent=11 // pred_region
          _
        $region36: #{tpu_custom_call.1} parent=11 // pred_fallthru
          _
      $region12: #{tpu_custom_call.1} parent=5 // pred_fallthru
        _
      %p243 = scmp.lt.s32.totalorder %s21, 2
      // Predicated region
      $region37: #{tpu_custom_call.1} parent=5 // pred_check
        %p244 = pneg %p243
      $region38: #{tpu_custom_call.1} parent=5 // pred_check_branch
        %246 = sbr.rel (%p244) target = $region40
      $region39: #{tpu_custom_call.1} parent=5 // pred_region
        // Predicated region
        $region41: #{tpu_custom_call.1} parent=39 // pred_check
          %p247 = pneg %p41
        $region42: #{tpu_custom_call.1} parent=39 // pred_check_branch
          %249 = sbr.rel (%p247) target = $region44
        $region43: #{tpu_custom_call.1} parent=39 // pred_region
          %s250 = sand.u32 %s31, 1
          %s251 = scalar_lea.sflag [#allocation4], %s250
          %s252 = sand.u32 %s31, 1
          %s253 = smul.addr %s252, 64
          %s254 = scalar_lea.vmem [#allocation3], %s253
          %256 = vsyncadd %s251, 0
          %s257 = smul.addr %s21, 8
          %s258 = smul.addr %s257, 8
          %s259 = scalar_lea.hbm %s0, %s258
          %s260 = sshll.u32 %s259, 4
          %s261 = int_to_ptr.hbm [resolvable:$true] %s260
          %s262 = sshll.u32 %s254, 4
          %s263 = int_to_ptr.vmem [resolvable:$true] %s262
          %268 = dma.hbm_to_vmem [thread:$0]  %s261, 1024, %s263, %s251, 256, 256, 16
        $region44: #{tpu_custom_call.1} parent=39 // pred_fallthru
          _
      $region40: #{tpu_custom_call.1} parent=5 // pred_fallthru
        _
      %p269 = scmp.le.s32.totalorder 1, %s21
      %p270 = scmp.lt.s32.totalorder %s21, 3
      %p271 = pnand %p269, %p270
      %p272 = pneg %p271
      // Predicated region
      $region45: #{tpu_custom_call.1} parent=5 // pred_check
        _
      $region46: #{tpu_custom_call.1} parent=5 // pred_check_branch
        %274 = sbr.rel (%p271) target = $region48
      $region47: #{tpu_custom_call.1} parent=5 // pred_region
        %s275 = ssub.s32 %s21, 1
        %s276 = sand.u32 %s34, 1
        %s277 = scalar_lea.sflag [#allocation4], %s276
        %s278 = sand.u32 %s34, 1
        %s279 = smul.addr %s278, 64
        %s280 = scalar_lea.vmem [#allocation3], %s279
        // Predicated region
        $region49: #{tpu_custom_call.1} parent=47 // pred_check
          %p281 = pneg %p47
        $region50: #{tpu_custom_call.1} parent=47 // pred_check_branch
          %283 = sbr.rel (%p281) target = $region52
        $region51: #{tpu_custom_call.1} parent=47 // pred_region
          %285 = dma.done %s277, 1024
        $region52: #{tpu_custom_call.1} parent=47 // pred_fallthru
          _
        // Predicated region
        $region53: #{tpu_custom_call.1} parent=47 // pred_check
          %p286 = pneg %p152
        $region54: #{tpu_custom_call.1} parent=47 // pred_check_branch
          %288 = sbr.rel (%p286) target = $region56
        $region55: #{tpu_custom_call.1} parent=47 // pred_region
          %290 = dma.done [#allocation7], 8192
        $region56: #{tpu_custom_call.1} parent=47 // pred_fallthru
          _
        %s291 = sand.u32 %s34, 1
        %s292 = scalar_lea.sflag [#allocation4], %s291
        %s293 = sand.u32 %s34, 1
        %s294 = smul.addr %s293, 64
        %s295 = scalar_lea.vmem [#allocation3], %s294
        %p296 = pneg %p47
        %p297 = pneg %p44
        %p298 = pneg %p68
        %p299 = pneg %p65
        %p300 = pneg %p89
        %p301 = pneg %p86
        %p302 = pneg %p110
        %p303 = pneg %p107
        %p304 = pneg %p131
        %p305 = pneg %p128
        %p306 = pneg %p152
        %p307 = pneg %p149
        %p308 = pneg %p173
        %p309 = pneg %p170
        %p310 = pneg %p199
        %p311 = pneg %p196
        %s312 = sand.u32 %s186, 1
        %s313 = scalar_lea.sflag [#allocation5], %s312
        %s314 = sand.u32 %s186, 1
        %s315 = smul.addr %s314, 64
        %s316 = scalar_lea.vmem [#allocation8], %s315
        %v317 = vld [vmem:[%s280] sm:$0xff]
        %v318 = vld [vmem:[%s280 + $0x8] sm:$0xff]
        %v319 = vld [vmem:[%s280 + $0x10] sm:$0xff]
        %v320 = vld [vmem:[%s280 + $0x18] sm:$0xff]
        %v321 = vld [vmem:[%s280 + $0x20] sm:$0xff]
        %v322 = vld [vmem:[%s280 + $0x28] sm:$0xff]
        %v323 = vld [vmem:[%s280 + $0x30] sm:$0xff]
        %v324 = vld [vmem:[%s280 + $0x38] sm:$0xff]
        %v325 = vadd.f32 %v317, %v318
        %326 = vadd.xlane.f32.xlu0 %v325
        %v327 = vpop.xlane.xlu0 %326
        %v328 = vadd.f32 %v319, %v320
        %329 = vadd.xlane.f32.xlu0 %v328
        %v330 = vpop.xlane.xlu0 %329
        %v331 = vadd.f32 %v321, %v322
        %332 = vadd.xlane.f32.xlu0 %v331
        %v333 = vpop.xlane.xlu0 %332
        %v334 = vadd.f32 %v323, %v324
        %335 = vadd.xlane.f32.xlu0 %v334
        %v336 = vpop.xlane.xlu0 %335
        %v337 = vmul.f32 %v327, 0.00390625
        %v338 = vmul.f32 %v330, 0.00390625
        %v339 = vmul.f32 %v333, 0.00390625
        %v340 = vmul.f32 %v336, 0.00390625
        %v341 = vmax.f32 %v317, %v318
        %342 = vmax.xlane.f32.xlu0 %v341
        %v343 = vpop.xlane.xlu0 %342
        %v344 = vmax.f32 %v319, %v320
        %345 = vmax.xlane.f32.xlu0 %v344
        %v346 = vpop.xlane.xlu0 %345
        %v347 = vmax.f32 %v321, %v322
        %348 = vmax.xlane.f32.xlu0 %v347
        %v349 = vpop.xlane.xlu0 %348
        %v350 = vmax.f32 %v323, %v324
        %351 = vmax.xlane.f32.xlu0 %v350
        %v352 = vpop.xlane.xlu0 %351
        %v353 = vld [vmem:[%s1] sm:$0xff]
        %v354 = vld [vmem:[%s1 + $0x8] sm:$0xff]
        %v355 = vld [vmem:[%s1 + $0x10] sm:$0xff]
        %v356 = vld [vmem:[%s1 + $0x18] sm:$0xff]
        %v357 = vld [vmem:[%s2] sm:$0x1]
        %v362 = vlaneseq
        %v363 = vand.u32 %v362, 127
        %v364 = vperm.slane %v337, %v363
        %v365 = vadd.s32 %v363, 4294967288
        %v366 = vperm.slane %v338, %v365
        %vm367 = vcmask 130112
        %v368 = vsel %vm367, %v366, %v364
        %v369 = vadd.s32 %v363, 4294967280
        %v370 = vperm.slane %v339, %v369
        %vm371 = vcmask 195712
        %v372 = vsel %vm371, %v370, %v368
        %v373 = vadd.s32 %v363, 4294967272
        %v374 = vperm.slane %v340, %v373
        %vm375 = vcmask 261312
        %v376 = vsel %vm375, %v374, %v372
        %vm377 = vcmask 261120
        %v378 = vsel %vm377, %v376, 0
        %380 = vmatpush.msra.mxu0 0.0
        %381 = vmatpush.msra.mxu0 0.0
        %382 = vmatpush.msra.mxu0 0.0
        %383 = vmatpush.msra.mxu0 0.0
        %384 = vmatpush.msra.mxu0 0.0
        %385 = vmatpush.msra.mxu0 0.0
        %386 = vmatpush.msra.mxu0 0.0
        %387 = vmatpush.msra.mxu0 0.0
        %388 = vmatpush.msra.mxu0 0.0
        %389 = vmatpush.msra.mxu0 0.0
        %390 = vmatpush.msra.mxu0 0.0
        %391 = vmatpush.msra.mxu0 0.0
        %392 = vmatpush.msra.mxu0 %v356
        %393 = vmatpush.msra.mxu0 %v355
        %394 = vmatpush.msra.mxu0 %v354
        %395 = vmatpush.msra.mxu0 %v353
        %396 = vmatmul.f32.gmra.mxu0 %v378
        %v397 = vpop.f32.mrf.mxu0
        %v398 = vadd.f32 %v357, %v397
        %399 = vdwg.mxu0
        %v400 = vmax.f32 %v398, 0.0
        %v405 = vperm.slane %v343, %v363
        %v406 = vperm.slane %v346, %v365
        %v407 = vsel %vm367, %v406, %v405
        %v408 = vperm.slane %v349, %v369
        %v409 = vsel %vm371, %v408, %v407
        %v410 = vperm.slane %v352, %v373
        %v411 = vsel %vm375, %v410, %v409
        %v412 = vsel %vm377, %v411, 0
        %414 = vmatpush.msra.mxu0 0.0
        %415 = vmatpush.msra.mxu0 0.0
        %416 = vmatpush.msra.mxu0 0.0
        %417 = vmatpush.msra.mxu0 0.0
        %418 = vmatpush.msra.mxu0 0.0
        %419 = vmatpush.msra.mxu0 0.0
        %420 = vmatpush.msra.mxu0 0.0
        %421 = vmatpush.msra.mxu0 0.0
        %422 = vmatpush.msra.mxu0 0.0
        %423 = vmatpush.msra.mxu0 0.0
        %424 = vmatpush.msra.mxu0 0.0
        %425 = vmatpush.msra.mxu0 0.0
        %426 = vmatpush.msra.mxu0 %v356
        %427 = vmatpush.msra.mxu0 %v355
        %428 = vmatpush.msra.mxu0 %v354
        %429 = vmatpush.msra.mxu0 %v353
        %430 = vmatmul.f32.gmra.mxu0 %v412
        %v431 = vpop.f32.mrf.mxu0
        %v432 = vadd.f32 %v357, %v431
        %433 = vdwg.mxu0
        %v434 = vmax.f32 %v432, 0.0
        %v435 = vadd.f32 %v400, %v434
        %v436 = vld [vmem:[%s3] sm:$0x3]
        %v437 = vld [vmem:[%s4] sm:$0x1]
        %vm438 = vcmask 15360
        %v440 = vsel %vm438, %v435, 0
        %vm442 = vcmask 1041408
        %v444 = vsel %vm442, %v436, 0
        %446 = vmatpush.msra.mxu0 0.0
        %447 = vmatpush.msra.mxu0 0.0
        %448 = vmatpush.msra.mxu0 0.0
        %449 = vmatpush.msra.mxu0 0.0
        %450 = vmatpush.msra.mxu0 0.0
        %451 = vmatpush.msra.mxu0 0.0
        %452 = vmatpush.msra.mxu0 0.0
        %453 = vmatpush.msra.mxu0 0.0
        %454 = vmatpush.msra.mxu0 0.0
        %455 = vmatpush.msra.mxu0 0.0
        %456 = vmatpush.msra.mxu0 0.0
        %457 = vmatpush.msra.mxu0 0.0
        %458 = vmatpush.msra.mxu0 0.0
        %459 = vmatpush.msra.mxu0 0.0
        %460 = vmatpush.msra.mxu0 0.0
        %461 = vmatpush.msra.mxu0 %v444
        %462 = vmatmul.f32.gmra.mxu0 %v440
        %v463 = vpop.f32.mrf.mxu0
        %v464 = vadd.f32 %v437, %v463
        %465 = vdwg.mxu0
        %v466 = vsub.f32 0.0, %v464
        %v467 = vmul.f32 %v466, 1.442695
        %v468 = vpow.pop %v467
        %v469 = vadd.f32 %v468, 1.0
        %v470 = vrcp.pop %v469
        %v471 = vperm.slane %v470, 0
        %v472 = vlaneseq
        %v473 = vshrl.u32 %v472, 7
        %475 = vset.pattern.permute.xlu0 %v473
        %476 = vperm.xlu0 %475, %v471
        %v477 = vpop.permute.xlu0 %476
        %v478 = vlaneseq
        %v479 = vshrl.u32 %v478, 7
        %v480 = vadd.s32 %v479, 8
        %481 = vset.pattern.permute.xlu0 %v480
        %482 = vperm.xlu0 %481, %v471
        %v483 = vpop.permute.xlu0 %482
        %v484 = vlaneseq
        %v485 = vshrl.u32 %v484, 7
        %v486 = vadd.s32 %v485, 16
        %487 = vset.pattern.permute.xlu0 %v486
        %488 = vperm.xlu0 %487, %v471
        %v489 = vpop.permute.xlu0 %488
        %v490 = vlaneseq
        %v491 = vshrl.u32 %v490, 7
        %v492 = vadd.s32 %v491, 24
        %493 = vset.pattern.permute.xlu0 %v492
        %494 = vperm.xlu0 %493, %v471
        %v495 = vpop.permute.xlu0 %494
        %v496 = vmul.f32 %v317, %v477
        %v497 = vmul.f32 %v318, %v477
        %v498 = vmul.f32 %v319, %v483
        %v499 = vmul.f32 %v320, %v483
        %v500 = vmul.f32 %v321, %v489
        %v501 = vmul.f32 %v322, %v489
        %v502 = vmul.f32 %v323, %v495
        %v503 = vmul.f32 %v324, %v495
        %v504 = vmax.f32 %v496, %v500
        %v505 = vmax.f32 %v498, %v502
        %v506 = vmax.f32 %v504, %v505
        %v507 = vrot.slane %v506, 4
        %v508 = vmax.f32 %v506, %v507
        %v509 = vrot.slane %v508, 2
        %v510 = vmax.f32 %v508, %v509
        %v511 = vrot.slane %v510, 1
        %v512 = vmax.f32 %v510, %v511
        %v513 = vmax.f32 %v497, %v501
        %v514 = vmax.f32 %v499, %v503
        %v515 = vmax.f32 %v513, %v514
        %v516 = vrot.slane %v515, 4
        %v517 = vmax.f32 %v515, %v516
        %v518 = vrot.slane %v517, 2
        %v519 = vmax.f32 %v517, %v518
        %v520 = vrot.slane %v519, 1
        %v521 = vmax.f32 %v519, %v520
        %v522 = vadd.f32 %v496, %v498
        %v523 = vadd.f32 %v522, %v500
        %v524 = vadd.f32 %v523, %v502
        %v525 = vrot.slane %v524, 4
        %v526 = vadd.f32 %v524, %v525
        %v527 = vrot.slane %v526, 2
        %v528 = vadd.f32 %v526, %v527
        %v529 = vrot.slane %v528, 1
        %v530 = vadd.f32 %v528, %v529
        %v531 = vadd.f32 %v497, %v499
        %v532 = vadd.f32 %v531, %v501
        %v533 = vadd.f32 %v532, %v503
        %v534 = vrot.slane %v533, 4
        %v535 = vadd.f32 %v533, %v534
        %v536 = vrot.slane %v535, 2
        %v537 = vadd.f32 %v535, %v536
        %v538 = vrot.slane %v537, 1
        %v539 = vadd.f32 %v537, %v538
        %v540 = vmul.f32 %v530, 0.03125
        %v541 = vmul.f32 %v539, 0.03125
        %v542 = vpack.c.bf16 %v512, %v512
        %v543 = vpack.c.bf16 %v521, %v521
        %v544 = vpack.c.bf16 %v540, %v540
        %v545 = vpack.c.bf16 %v541, %v541
        %v546 = vld [vmem:[#allocation6] sm:$0xff]
        %v547 = vld [vmem:[#allocation6 + $0x8] sm:$0xff]
        %v548 = vld [vmem:[#allocation6 + $0x10] sm:$0xff]
        %v549 = vld [vmem:[#allocation6 + $0x18] sm:$0xff]
        %v550 = vld [vmem:[#allocation6 + $0x20] sm:$0xff]
        %v551 = vld [vmem:[#allocation6 + $0x28] sm:$0xff]
        %v552 = vld [vmem:[#allocation6 + $0x30] sm:$0xff]
        %v553 = vld [vmem:[#allocation6 + $0x38] sm:$0xff]
        %v554 = vld [vmem:[#allocation6 + $0x40] sm:$0xff]
        %v555 = vld [vmem:[#allocation6 + $0x48] sm:$0xff]
        %v556 = vld [vmem:[#allocation6 + $0x50] sm:$0xff]
        %v557 = vld [vmem:[#allocation6 + $0x58] sm:$0xff]
        %v558 = vld [vmem:[#allocation6 + $0x60] sm:$0xff]
        %v559 = vld [vmem:[#allocation6 + $0x68] sm:$0xff]
        %v560 = vld [vmem:[#allocation6 + $0x70] sm:$0xff]
        %v561 = vld [vmem:[#allocation6 + $0x78] sm:$0xff]
        %v562 = vld [vmem:[#allocation6 + $0x80] sm:$0xff]
        %v563 = vld [vmem:[#allocation6 + $0x88] sm:$0xff]
        %v564 = vld [vmem:[#allocation6 + $0x90] sm:$0xff]
        %v565 = vld [vmem:[#allocation6 + $0x98] sm:$0xff]
        %v566 = vld [vmem:[#allocation6 + $0xa0] sm:$0xff]
        %v567 = vld [vmem:[#allocation6 + $0xa8] sm:$0xff]
        %v568 = vld [vmem:[#allocation6 + $0xb0] sm:$0xff]
        %v569 = vld [vmem:[#allocation6 + $0xb8] sm:$0xff]
        %v570 = vld [vmem:[#allocation6 + $0xc0] sm:$0xff]
        %v571 = vld [vmem:[#allocation6 + $0xc8] sm:$0xff]
        %v572 = vld [vmem:[#allocation6 + $0xd0] sm:$0xff]
        %v573 = vld [vmem:[#allocation6 + $0xd8] sm:$0xff]
        %v574 = vld [vmem:[#allocation6 + $0xe0] sm:$0xff]
        %v575 = vld [vmem:[#allocation6 + $0xe8] sm:$0xff]
        %v576 = vld [vmem:[#allocation6 + $0xf0] sm:$0xff]
        %v577 = vld [vmem:[#allocation6 + $0xf8] sm:$0xff]
        %v578 = vld [vmem:[#allocation6 + $0x100] sm:$0xff]
        %v579 = vld [vmem:[#allocation6 + $0x108] sm:$0xff]
        %v580 = vld [vmem:[#allocation6 + $0x110] sm:$0xff]
        %v581 = vld [vmem:[#allocation6 + $0x118] sm:$0xff]
        %v582 = vld [vmem:[#allocation6 + $0x120] sm:$0xff]
        %v583 = vld [vmem:[#allocation6 + $0x128] sm:$0xff]
        %v584 = vld [vmem:[#allocation6 + $0x130] sm:$0xff]
        %v585 = vld [vmem:[#allocation6 + $0x138] sm:$0xff]
        %v586 = vld [vmem:[#allocation6 + $0x140] sm:$0xff]
        %v587 = vld [vmem:[#allocation6 + $0x148] sm:$0xff]
        %v588 = vld [vmem:[#allocation6 + $0x150] sm:$0xff]
        %v589 = vld [vmem:[#allocation6 + $0x158] sm:$0xff]
        %v590 = vld [vmem:[#allocation6 + $0x160] sm:$0xff]
        %v591 = vld [vmem:[#allocation6 + $0x168] sm:$0xff]
        %v592 = vld [vmem:[#allocation6 + $0x170] sm:$0xff]
        %v593 = vld [vmem:[#allocation6 + $0x178] sm:$0xff]
        %v594 = vld [vmem:[#allocation6 + $0x180] sm:$0xff]
        %v595 = vld [vmem:[#allocation6 + $0x188] sm:$0xff]
        %v596 = vld [vmem:[#allocation6 + $0x190] sm:$0xff]
        %v597 = vld [vmem:[#allocation6 + $0x198] sm:$0xff]
        %v598 = vld [vmem:[#allocation6 + $0x1a0] sm:$0xff]
        %v599 = vld [vmem:[#allocation6 + $0x1a8] sm:$0xff]
        %v600 = vld [vmem:[#allocation6 + $0x1b0] sm:$0xff]
        %v601 = vld [vmem:[#allocation6 + $0x1b8] sm:$0xff]
        %v602 = vld [vmem:[#allocation6 + $0x1c0] sm:$0xff]
        %v603 = vld [vmem:[#allocation6 + $0x1c8] sm:$0xff]
        %v604 = vld [vmem:[#allocation6 + $0x1d0] sm:$0xff]
        %v605 = vld [vmem:[#allocation6 + $0x1d8] sm:$0xff]
        %v606 = vld [vmem:[#allocation6 + $0x1e0] sm:$0xff]
        %v607 = vld [vmem:[#allocation6 + $0x1e8] sm:$0xff]
        %v608 = vld [vmem:[#allocation6 + $0x1f0] sm:$0xff]
        %v609 = vld [vmem:[#allocation6 + $0x1f8] sm:$0xff]
        %s610 = sld [smem:[#allocation2]]
        %v611 = vstv %s610
        %v676 = vunpack.c.l.b16 %v546
        %v677 = vunpack.c.h.b16 %v546
        %v678 = vunpack.c.l.b16 %v547
        %v679 = vunpack.c.h.b16 %v547
        %v680 = vunpack.c.l.b16 %v548
        %v681 = vunpack.c.h.b16 %v548
        %v682 = vunpack.c.l.b16 %v549
        %v683 = vunpack.c.h.b16 %v549
        %v684 = vunpack.c.l.b16 %v550
        %v685 = vunpack.c.h.b16 %v550
        %v686 = vunpack.c.l.b16 %v551
        %v687 = vunpack.c.h.b16 %v551
        %v688 = vunpack.c.l.b16 %v552
        %v689 = vunpack.c.h.b16 %v552
        %v690 = vunpack.c.l.b16 %v553
        %v691 = vunpack.c.h.b16 %v553
        %v692 = vunpack.c.l.b16 %v554
        %v693 = vunpack.c.h.b16 %v554
        %v694 = vunpack.c.l.b16 %v555
        %v695 = vunpack.c.h.b16 %v555
        %v696 = vunpack.c.l.b16 %v556
        %v697 = vunpack.c.h.b16 %v556
        %v698 = vunpack.c.l.b16 %v557
        %v699 = vunpack.c.h.b16 %v557
        %v700 = vunpack.c.l.b16 %v558
        %v701 = vunpack.c.h.b16 %v558
        %v702 = vunpack.c.l.b16 %v559
        %v703 = vunpack.c.h.b16 %v559
        %v704 = vunpack.c.l.b16 %v560
        %v705 = vunpack.c.h.b16 %v560
        %v706 = vunpack.c.l.b16 %v561
        %v707 = vunpack.c.h.b16 %v561
        %v708 = vunpack.c.l.b16 %v562
        %v709 = vunpack.c.h.b16 %v562
        %v710 = vunpack.c.l.b16 %v563
        %v711 = vunpack.c.h.b16 %v563
        %v712 = vunpack.c.l.b16 %v564
        %v713 = vunpack.c.h.b16 %v564
        %v714 = vunpack.c.l.b16 %v565
        %v715 = vunpack.c.h.b16 %v565
        %v716 = vunpack.c.l.b16 %v566
        %v717 = vunpack.c.h.b16 %v566
        %v718 = vunpack.c.l.b16 %v567
        %v719 = vunpack.c.h.b16 %v567
        %v720 = vunpack.c.l.b16 %v568
        %v721 = vunpack.c.h.b16 %v568
        %v722 = vunpack.c.l.b16 %v569
        %v723 = vunpack.c.h.b16 %v569
        %v724 = vunpack.c.l.b16 %v570
        %v725 = vunpack.c.h.b16 %v570
        %v726 = vunpack.c.l.b16 %v571
        %v727 = vunpack.c.h.b16 %v571
        %v728 = vunpack.c.l.b16 %v572
        %v729 = vunpack.c.h.b16 %v572
        %v730 = vunpack.c.l.b16 %v573
        %v731 = vunpack.c.h.b16 %v573
        %v732 = vunpack.c.l.b16 %v574
        %v733 = vunpack.c.h.b16 %v574
        %v734 = vunpack.c.l.b16 %v575
        %v735 = vunpack.c.h.b16 %v575
        %v736 = vunpack.c.l.b16 %v576
        %v737 = vunpack.c.h.b16 %v576
        %v738 = vunpack.c.l.b16 %v577
        %v739 = vunpack.c.h.b16 %v577
        %v740 = vunpack.c.l.b16 %v578
        %v741 = vunpack.c.h.b16 %v578
        %v742 = vunpack.c.l.b16 %v579
        %v743 = vunpack.c.h.b16 %v579
        %v744 = vunpack.c.l.b16 %v580
        %v745 = vunpack.c.h.b16 %v580
        %v746 = vunpack.c.l.b16 %v581
        %v747 = vunpack.c.h.b16 %v581
        %v748 = vunpack.c.l.b16 %v582
        %v749 = vunpack.c.h.b16 %v582
        %v750 = vunpack.c.l.b16 %v583
        %v751 = vunpack.c.h.b16 %v583
        %v752 = vunpack.c.l.b16 %v584
        %v753 = vunpack.c.h.b16 %v584
        %v754 = vunpack.c.l.b16 %v585
        %v755 = vunpack.c.h.b16 %v585
        %v756 = vunpack.c.l.b16 %v586
        %v757 = vunpack.c.h.b16 %v586
        %v758 = vunpack.c.l.b16 %v587
        %v759 = vunpack.c.h.b16 %v587
        %v760 = vunpack.c.l.b16 %v588
        %v761 = vunpack.c.h.b16 %v588
        %v762 = vunpack.c.l.b16 %v589
        %v763 = vunpack.c.h.b16 %v589
        %v764 = vunpack.c.l.b16 %v590
        %v765 = vunpack.c.h.b16 %v590
        %v766 = vunpack.c.l.b16 %v591
        %v767 = vunpack.c.h.b16 %v591
        %v768 = vunpack.c.l.b16 %v592
        %v769 = vunpack.c.h.b16 %v592
        %v770 = vunpack.c.l.b16 %v593
        %v771 = vunpack.c.h.b16 %v593
        %v772 = vunpack.c.l.b16 %v594
        %v773 = vunpack.c.h.b16 %v594
        %v774 = vunpack.c.l.b16 %v595
        %v775 = vunpack.c.h.b16 %v595
        %v776 = vunpack.c.l.b16 %v596
        %v777 = vunpack.c.h.b16 %v596
        %v778 = vunpack.c.l.b16 %v597
        %v779 = vunpack.c.h.b16 %v597
        %v780 = vunpack.c.l.b16 %v598
        %v781 = vunpack.c.h.b16 %v598
        %v782 = vunpack.c.l.b16 %v599
        %v783 = vunpack.c.h.b16 %v599
        %v784 = vunpack.c.l.b16 %v600
        %v785 = vunpack.c.h.b16 %v600
        %v786 = vunpack.c.l.b16 %v601
        %v787 = vunpack.c.h.b16 %v601
        %v788 = vunpack.c.l.b16 %v602
        %v789 = vunpack.c.h.b16 %v602
        %v790 = vunpack.c.l.b16 %v603
        %v791 = vunpack.c.h.b16 %v603
        %v792 = vunpack.c.l.b16 %v604
        %v793 = vunpack.c.h.b16 %v604
        %v794 = vunpack.c.l.b16 %v605
        %v795 = vunpack.c.h.b16 %v605
        %v796 = vunpack.c.l.b16 %v606
        %v797 = vunpack.c.h.b16 %v606
        %v798 = vunpack.c.l.b16 %v607
        %v799 = vunpack.c.h.b16 %v607
        %v800 = vunpack.c.l.b16 %v608
        %v801 = vunpack.c.h.b16 %v608
        %v802 = vunpack.c.l.b16 %v609
        %v803 = vunpack.c.h.b16 %v609
        %v804 = vpack.c.b16 %v678, %v676
        %v805 = vpack.c.b16 %v679, %v677
        %v806 = vpack.c.b16 %v682, %v680
        %v807 = vpack.c.b16 %v683, %v681
        %v808 = vpack.c.b16 %v686, %v684
        %v809 = vpack.c.b16 %v687, %v685
        %v810 = vpack.c.b16 %v690, %v688
        %v811 = vpack.c.b16 %v691, %v689
        %v812 = vpack.c.b16 %v694, %v692
        %v813 = vpack.c.b16 %v695, %v693
        %v814 = vpack.c.b16 %v698, %v696
        %v815 = vpack.c.b16 %v699, %v697
        %v816 = vpack.c.b16 %v702, %v700
        %v817 = vpack.c.b16 %v703, %v701
        %v818 = vpack.c.b16 %v706, %v704
        %v819 = vpack.c.b16 %v707, %v705
        %v820 = vpack.c.b16 %v710, %v708
        %v821 = vpack.c.b16 %v711, %v709
        %v822 = vpack.c.b16 %v714, %v712
        %v823 = vpack.c.b16 %v715, %v713
        %v824 = vpack.c.b16 %v718, %v716
        %v825 = vpack.c.b16 %v719, %v717
        %v826 = vpack.c.b16 %v722, %v720
        %v827 = vpack.c.b16 %v723, %v721
        %v828 = vpack.c.b16 %v726, %v724
        %v829 = vpack.c.b16 %v727, %v725
        %v830 = vpack.c.b16 %v730, %v728
        %v831 = vpack.c.b16 %v731, %v729
        %v832 = vpack.c.b16 %v734, %v732
        %v833 = vpack.c.b16 %v735, %v733
        %v834 = vpack.c.b16 %v738, %v736
        %v835 = vpack.c.b16 %v739, %v737
        %v836 = vpack.c.b16 %v742, %v740
        %v837 = vpack.c.b16 %v743, %v741
        %v838 = vpack.c.b16 %v746, %v744
        %v839 = vpack.c.b16 %v747, %v745
        %v840 = vpack.c.b16 %v750, %v748
        %v841 = vpack.c.b16 %v751, %v749
        %v842 = vpack.c.b16 %v754, %v752
        %v843 = vpack.c.b16 %v755, %v753
        %v844 = vpack.c.b16 %v758, %v756
        %v845 = vpack.c.b16 %v759, %v757
        %v846 = vpack.c.b16 %v762, %v760
        %v847 = vpack.c.b16 %v763, %v761
        %v848 = vpack.c.b16 %v766, %v764
        %v849 = vpack.c.b16 %v767, %v765
        %v850 = vpack.c.b16 %v770, %v768
        %v851 = vpack.c.b16 %v771, %v769
        %v852 = vpack.c.b16 %v774, %v772
        %v853 = vpack.c.b16 %v775, %v773
        %v854 = vpack.c.b16 %v778, %v776
        %v855 = vpack.c.b16 %v779, %v777
        %v856 = vpack.c.b16 %v782, %v780
        %v857 = vpack.c.b16 %v783, %v781
        %v858 = vpack.c.b16 %v786, %v784
        %v859 = vpack.c.b16 %v787, %v785
        %v860 = vpack.c.b16 %v790, %v788
        %v861 = vpack.c.b16 %v791, %v789
        %v862 = vpack.c.b16 %v794, %v792
        %v863 = vpack.c.b16 %v795, %v793
        %v864 = vpack.c.b16 %v798, %v796
        %v865 = vpack.c.b16 %v799, %v797
        %v866 = vpack.c.b16 %v802, %v800
        %v867 = vpack.c.b16 %v803, %v801
        %932 = vmatpush.bf16.msra.mxu0 %v818
        %933 = vmatpush.bf16.msra.mxu0 %v816
        %934 = vmatpush.bf16.msra.mxu0 %v814
        %935 = vmatpush.bf16.msra.mxu0 %v812
        %936 = vmatpush.bf16.msra.mxu0 %v810
        %937 = vmatpush.bf16.msra.mxu0 %v808
        %938 = vmatpush.bf16.msra.mxu0 %v806
        %939 = vmatpush.bf16.msra.mxu0 %v804
        %940 = vmatmul.bf16.gmra.mxu0 %v542
        %v941 = vpop.f32.mrf.mxu0
        %v942 = vadd.f32 %v611, %v941
        %v943 = vpop.f32.mrf.mxu0
        %944 = vdwg.mxu0
        %945 = vmatpush.bf16.msra.mxu0 %v834
        %946 = vmatpush.bf16.msra.mxu0 %v832
        %947 = vmatpush.bf16.msra.mxu0 %v830
        %948 = vmatpush.bf16.msra.mxu0 %v828
        %949 = vmatpush.bf16.msra.mxu0 %v826
        %950 = vmatpush.bf16.msra.mxu0 %v824
        %951 = vmatpush.bf16.msra.mxu0 %v822
        %952 = vmatpush.bf16.msra.mxu0 %v820
        %953 = vmatmul.bf16.gmra.mxu0 %v543
        %v954 = vpop.f32.mrf.mxu0
        %v955 = vadd.f32 %v942, %v954
        %v956 = vpop.f32.mrf.mxu0
        %957 = vdwg.mxu0
        %958 = vmatpush.bf16.msra.mxu0 %v850
        %959 = vmatpush.bf16.msra.mxu0 %v848
        %960 = vmatpush.bf16.msra.mxu0 %v846
        %961 = vmatpush.bf16.msra.mxu0 %v844
        %962 = vmatpush.bf16.msra.mxu0 %v842
        %963 = vmatpush.bf16.msra.mxu0 %v840
        %964 = vmatpush.bf16.msra.mxu0 %v838
        %965 = vmatpush.bf16.msra.mxu0 %v836
        %966 = vmatmul.bf16.gmra.mxu0 %v544
        %v967 = vpop.f32.mrf.mxu0
        %v968 = vadd.f32 %v955, %v967
        %v969 = vpop.f32.mrf.mxu0
        %970 = vdwg.mxu0
        %971 = vmatpush.bf16.msra.mxu0 %v866
        %972 = vmatpush.bf16.msra.mxu0 %v864
        %973 = vmatpush.bf16.msra.mxu0 %v862
        %974 = vmatpush.bf16.msra.mxu0 %v860
        %975 = vmatpush.bf16.msra.mxu0 %v858
        %976 = vmatpush.bf16.msra.mxu0 %v856
        %977 = vmatpush.bf16.msra.mxu0 %v854
        %978 = vmatpush.bf16.msra.mxu0 %v852
        %979 = vmatmul.bf16.gmra.mxu0 %v545
        %v980 = vpop.f32.mrf.mxu0
        %v981 = vadd.f32 %v968, %v980
        %v982 = vpop.f32.mrf.mxu0
        %983 = vdwg.mxu0
        %984 = vmatpush.bf16.msra.mxu0 %v819
        %985 = vmatpush.bf16.msra.mxu0 %v817
        %986 = vmatpush.bf16.msra.mxu0 %v815
        %987 = vmatpush.bf16.msra.mxu0 %v813
        %988 = vmatpush.bf16.msra.mxu0 %v811
        %989 = vmatpush.bf16.msra.mxu0 %v809
        %990 = vmatpush.bf16.msra.mxu0 %v807
        %991 = vmatpush.bf16.msra.mxu0 %v805
        %992 = vmatmul.bf16.gmra.mxu0 %v542
        %v993 = vpop.f32.mrf.mxu0
        %v994 = vadd.f32 %v611, %v993
        %v995 = vpop.f32.mrf.mxu0
        %996 = vdwg.mxu0
        %997 = vmatpush.bf16.msra.mxu0 %v835
        %998 = vmatpush.bf16.msra.mxu0 %v833
        %999 = vmatpush.bf16.msra.mxu0 %v831
        %1000 = vmatpush.bf16.msra.mxu0 %v829
        %1001 = vmatpush.bf16.msra.mxu0 %v827
        %1002 = vmatpush.bf16.msra.mxu0 %v825
        %1003 = vmatpush.bf16.msra.mxu0 %v823
        %1004 = vmatpush.bf16.msra.mxu0 %v821
        %1005 = vmatmul.bf16.gmra.mxu0 %v543
        %v1006 = vpop.f32.mrf.mxu0
        %v1007 = vadd.f32 %v994, %v1006
        %v1008 = vpop.f32.mrf.mxu0
        %1009 = vdwg.mxu0
        %1010 = vmatpush.bf16.msra.mxu0 %v851
        %1011 = vmatpush.bf16.msra.mxu0 %v849
        %1012 = vmatpush.bf16.msra.mxu0 %v847
        %1013 = vmatpush.bf16.msra.mxu0 %v845
        %1014 = vmatpush.bf16.msra.mxu0 %v843
        %1015 = vmatpush.bf16.msra.mxu0 %v841
        %1016 = vmatpush.bf16.msra.mxu0 %v839
        %1017 = vmatpush.bf16.msra.mxu0 %v837
        %1018 = vmatmul.bf16.gmra.mxu0 %v544
        %v1019 = vpop.f32.mrf.mxu0
        %v1020 = vadd.f32 %v1007, %v1019
        %v1021 = vpop.f32.mrf.mxu0
        %1022 = vdwg.mxu0
        %1023 = vmatpush.bf16.msra.mxu0 %v867
        %1024 = vmatpush.bf16.msra.mxu0 %v865
        %1025 = vmatpush.bf16.msra.mxu0 %v863
        %1026 = vmatpush.bf16.msra.mxu0 %v861
        %1027 = vmatpush.bf16.msra.mxu0 %v859
        %1028 = vmatpush.bf16.msra.mxu0 %v857
        %1029 = vmatpush.bf16.msra.mxu0 %v855
        %1030 = vmatpush.bf16.msra.mxu0 %v853
        %1031 = vmatmul.bf16.gmra.mxu0 %v545
        %v1032 = vpop.f32.mrf.mxu0
        %v1033 = vadd.f32 %v1020, %v1032
        %v1034 = vpop.f32.mrf.mxu0
        %1035 = vdwg.mxu0
        %v1036 = vsub.f32 0.0, %v981
        %v1037 = vsub.f32 0.0, %v1033
        %v1038 = vmul.f32 %v1036, 1.442695
        %v1039 = vpow.pop %v1038
        %v1040 = vmul.f32 %v1037, 1.442695
        %v1041 = vpow.pop %v1040
        %v1042 = vadd.f32 %v1039, 1.0
        %v1043 = vadd.f32 %v1041, 1.0
        %v1044 = vrcp.pop %v1042
        %v1045 = vrcp.pop %v1043
        %v1046 = vperm.slane %v1044, 0
        %v1047 = vperm.slane %v1045, 0
        %v1048 = vmul.f32 %v496, %v1046
        %v1049 = vmul.f32 %v497, %v1047
        %v1050 = vmul.f32 %v498, %v1046
        %v1051 = vmul.f32 %v499, %v1047
        %v1052 = vmul.f32 %v500, %v1046
        %v1053 = vmul.f32 %v501, %v1047
        %v1054 = vmul.f32 %v502, %v1046
        %v1055 = vmul.f32 %v503, %v1047
        %1056 = vst [vmem:[%s316] sm:$0xff] %v1048
        %1057 = vst [vmem:[%s316 + $0x8] sm:$0xff] %v1049
        %1058 = vst [vmem:[%s316 + $0x10] sm:$0xff] %v1050
        %1059 = vst [vmem:[%s316 + $0x18] sm:$0xff] %v1051
        %1060 = vst [vmem:[%s316 + $0x20] sm:$0xff] %v1052
        %1061 = vst [vmem:[%s316 + $0x28] sm:$0xff] %v1053
        %1062 = vst [vmem:[%s316 + $0x30] sm:$0xff] %v1054
        %1063 = vst [vmem:[%s316 + $0x38] sm:$0xff] %v1055
        %s1064 = sand.u32 %s186, 1
        %s1065 = scalar_lea.sflag [#allocation5], %s1064
        %s1066 = sand.u32 %s186, 1
        %s1067 = smul.addr %s1066, 64
        %s1068 = scalar_lea.vmem [#allocation8], %s1067
        // Predicated region
        $region57: #{tpu_custom_call.1} parent=47 // pred_check
          %p1069 = pneg %p196
        $region58: #{tpu_custom_call.1} parent=47 // pred_check_branch
          %1071 = sbr.rel (%p1069) target = $region60
        $region59: #{tpu_custom_call.1} parent=47 // pred_region
          %1073 = vsyncadd %s1065, 0
          %s1074 = smul.addr %s26, 8
          %s1075 = smul.addr %s1074, 8
          %s1076 = scalar_lea.hbm %s7, %s1075
          %s1077 = sshll.u32 %s1068, 4
          %s1078 = int_to_ptr.vmem [resolvable:$true] %s1077
          %s1079 = sshll.u32 %s1076, 4
          %s1080 = int_to_ptr.hbm [resolvable:$true] %s1079
          %1085 = dma.vmem_to_hbm [thread:$0]  %s1078, 1024, %s1080, %s1065, 256, 256, 16
        $region60: #{tpu_custom_call.1} parent=47 // pred_fallthru
          _
      $region48: #{tpu_custom_call.1} parent=5 // pred_fallthru
        _
      %p1086 = scmp.le.s32.totalorder 2, %s21
      // Predicated region
      $region61: #{tpu_custom_call.1} parent=5 // pred_check
        %p1087 = pneg %p1086
      $region62: #{tpu_custom_call.1} parent=5 // pred_check_branch
        %1089 = sbr.rel (%p1087) target = $region64
      $region63: #{tpu_custom_call.1} parent=5 // pred_region
        %s1090 = ssub.s32 %s21, 2
        // Predicated region
        $region65: #{tpu_custom_call.1} parent=63 // pred_check
          %p1091 = pneg %p202
        $region66: #{tpu_custom_call.1} parent=63 // pred_check_branch
          %1093 = sbr.rel (%p1091) target = $region68
        $region67: #{tpu_custom_call.1} parent=63 // pred_region
          %s1094 = sand.u32 %s187, 1
          %s1095 = scalar_lea.sflag [#allocation5], %s1094
          %s1096 = sand.u32 %s187, 1
          %s1097 = smul.addr %s1096, 64
          %s1098 = scalar_lea.vmem [#allocation8], %s1097
          %1100 = dma.done %s1095, 1024
        $region68: #{tpu_custom_call.1} parent=63 // pred_fallthru
          _
      $region64: #{tpu_custom_call.1} parent=5 // pred_fallthru
        _
    $region6: #{tpu_custom_call.1} parent=1 // loop_footer
      %s25 = sadd.s32 1, %s21
    $region7: #{tpu_custom_call.1} parent=1 // loop_footer_branch
      %20 = sbr.rel target = $region3
    $region8: #{tpu_custom_call.1} parent=1 // loop_exit
      _
    %1101 = vsyncpa [#allocation4], 1
    %s1102 = scalar_lea.sflag [#allocation4], 1
    %1103 = vsyncpa %s1102, 1
    %1104 = vsyncpa [#allocation7], 1
    %1105 = vsyncpa [#allocation5], 1
    %s1106 = scalar_lea.sflag [#allocation5], 1
    %1107 = vsyncpa %s1106, 1

</llo_original>
